<compile_context>
chip_gen: v7x
topology: tpu7x:2x2x1
jax: 0.10.0
libtpu: 0.0.40
codegen_flags: <defaults>
</compile_context>

<pallas_src>
import enum
from dataclasses import dataclass
from typing import Optional, Dict, Any

import jax
import jax.numpy as jnp
from jax.experimental import pallas as pl
from jax.experimental.pallas import tpu as pltpu


class GNNs(enum.IntEnum):
    ATTENTION_GNN = 1
    SIMPLE_GNN = 2
    TRANSFORMER_ENCODER_GNN = 3
    TRANSFORMER_ENCODER = 4
    MESSAGE_PASSING_GNN = 5
    IDENTITY_GNN = 6
    GENERAL_GNN = 7


@dataclass
class GNNConfig:
    type: GNNs


# ----------------------------------------------------------------------------
# Pallas kernel: identity pass-through over the node hidden-feature matrix.
# Single HBM->HBM DMA — no VMEM staging, no grid, no per-tile overhead.
# ----------------------------------------------------------------------------
def _passthrough_kernel(h_hbm_ref, o_hbm_ref, copy_sem):
    cp = pltpu.make_async_copy(h_hbm_ref, o_hbm_ref, copy_sem)
    cp.start()
    cp.wait()


def _identity_forward(h: jax.Array) -> jax.Array:
    """Node-feature pass-through via a single direct HBM->HBM DMA.

    h: [num_nodes, node_hidden_dim] node hidden features (any N, any d, any dtype).
    NOTE: semantically this is `return h`; the kernel exists only to express the
    pass-through explicitly, and does the minimum possible data movement (one DMA,
    no VMEM round-trip, zero grid steps).
    """
    return pl.pallas_call(
        _passthrough_kernel,
        out_shape=jax.ShapeDtypeStruct(h.shape, h.dtype),
        in_specs=[pl.BlockSpec(memory_space=pl.ANY)],
        out_specs=pl.BlockSpec(memory_space=pl.ANY),
        scratch_shapes=[pltpu.SemaphoreType.DMA(())],
    )(h)


# ----------------------------------------------------------------------------
# JAX-side mirror of the GNN module.
# ----------------------------------------------------------------------------
class GNNJax:
    """JAX/Pallas mirror of the abstract `GNN` nn.Module.

    The base class has no trainable parameters; it only carries config and
    the name of the node-feature field ("hidden_feature") it operates on.
    A "graph" here is represented as a dict with an `ndata` mapping
    (feature name -> [num_nodes, node_hidden_dim] array), which is what the
    DGL forward contract touches.
    """

    def __init__(
        self,
        cfg: GNNConfig,
        node_hidden_dim: int,
        hidden_feature: str,
        edge_hidden_dim: Optional[int] = None,
    ) -> None:
        self.cfg = cfg
        self.node_hidden_dim = node_hidden_dim
        self.edge_hidden_dim = edge_hidden_dim
        self.hidden_feature = hidden_feature

    @property
    def name(self) -> str:
        return self.cfg.type.name

    def get_additional_losses(self) -> Dict[str, jax.Array]:
        return {}

    def forward(self, g: Dict[str, Any]) -> Dict[str, Any]:
        # Base-class contract: graph in -> graph out, node hidden features
        # of field `self.hidden_feature` passed through (identity GNN).
        h = g["ndata"][self.hidden_feature]
        assert h.shape[-1] == self.node_hidden_dim
        h_out = _identity_forward(h)
        out = {"ndata": dict(g["ndata"])}
        out["ndata"][self.hidden_feature] = h_out
        return out

    __call__ = forward


if __name__ == "__main__":
    key = jax.random.PRNGKey(0)

    num_nodes = 16
    node_hidden_dim = 32
    hidden_feature = "h"

    # Deterministic synthetic "graph": node features only (edges are not
    # touched by the base-class forward contract).
    h = jax.random.normal(key, (num_nodes, node_hidden_dim), dtype=jnp.float32)
    graph = {"ndata": {hidden_feature: h}}

    gnn = GNNJax(
        cfg=GNNConfig(type=GNNs.IDENTITY_GNN),
        node_hidden_dim=node_hidden_dim,
        hidden_feature=hidden_feature,
    )

    out_graph = gnn(graph)
    out_h = jax.block_until_ready(out_graph["ndata"][hidden_feature])

    # Sanity checks: identity semantics, no extra losses, name plumbing.
    assert out_h.shape == (num_nodes, node_hidden_dim)
    assert out_h.dtype == h.dtype
    assert bool(jnp.allclose(out_h, h))
    assert gnn.get_additional_losses() == {}
    assert gnn.name == "IDENTITY_GNN"

    print("KERNEL_OK")
</pallas_src>

<mosaic_0001>
module attributes {stable_mosaic.version = 11 : i64} {
  func.func @_passthrough_kernel(%arg0: memref<16x32xf32, #tpu.memory_space<any>>, %arg1: memref<16x32xf32, #tpu.memory_space<any>>, %arg2: memref<!tpu.dma_semaphore, #tpu.memory_space<semaphore_mem>>) attributes {dimension_semantics = [], scalar_prefetch = 0 : i64, scratch_operands = 1 : i64, tpu.core_type = #tpu.core_type<tc>} {
    tpu.enqueue_dma source(%arg0 : memref<16x32xf32, #tpu.memory_space<any>>) target(%arg1 : memref<16x32xf32, #tpu.memory_space<any>>) target_semaphore(%arg2 : memref<!tpu.dma_semaphore, #tpu.memory_space<semaphore_mem>>)
    tpu.wait_dma2 semaphore(%arg2 : memref<!tpu.dma_semaphore, #tpu.memory_space<semaphore_mem>>) src(%arg0 : memref<16x32xf32, #tpu.memory_space<any>>) dst(%arg1 : memref<16x32xf32, #tpu.memory_space<any>>)
    return
  }
}

</mosaic_0001>

<llo_original>
// kernel: tpu_custom_call.1
$region0: #{tpu_custom_call.1}
  #allocation0 [shape = 'u32[]', space=smem, size = 0x4, offset = 0x4, fixed_abs, tag = 'smem constant byte address 0x4 - core index']
  #allocation1 [shape = 'u32[144,128]{1,0:T(1,128)}', space=vmem, size = 0x12000, scoped, tag = 'internal scratch']
  #allocation2 [shape = 's32[1]{0}', space=sflag, size = 0x4, scoped, tag = 'scratch operand']
  #allocation3 [shape = 's32[]', space=sflag, size = 0x4, offset = 0, fixed_abs, tag = 'sflag constant byte address 0x0 - dummy sync flag']
  #allocation4 [shape = 'u32[0]{0}', space=smem, size = 0, offset = 0, fixed_abs, tag = 'smem constant byte address 0x0 - null']
  %s0 = inlined_call_operand.hbm [shape: f32[16,32], index: 0, kind: input, shape index: {}]
  %s1 = inlined_call_operand.hbm [shape: f32[16,32], index: 1, kind: output, shape index: {}]
  %s2 = sld [smem:[#allocation0]]
  $region2: #{tpu_custom_call.1} parent=0
    _
  %s4 = ssub.s32 1, %s2
  %s5 = scalar_select 0, %s4, %s2
  %s7 = sshll.u32 1, 14
  %s8 = sxor.u32 4294967295, %s7
  %s11 = sshll.u32 3, 24
  %s12 = sxor.u32 4294967295, %s11
  %s13 = sand.u32 0, %s12
  %s15 = sor.u32 %s13, 0
  %18 = dma.general %s0, 256, %s1, [#allocation2], [#allocation3], [#allocation4], %s15, 0
  %s19 = smul.u32 16, 1
  %s20 = sshll.u32 %s19, 4
  %21 = dma.done [#allocation2], %s20
  %22 = vsyncmov [#allocation2]
  %s23 = vpop.sfrf %22
  %p24 = scmp.eq.s32.totalorder %s23, 0
  %p25 = pneg %p24
  %27 = shalt.err (%p25)

</llo_original>
